<compile_context>
chip_gen: v5e
topology: v5e:2x2
jax: 0.10.0
libtpu: 0.0.40
codegen_flags: <defaults>
</compile_context>

<pallas_src>
import jax
import jax.numpy as jnp
from jax import lax
from jax.experimental import pallas as pl
from jax.experimental.pallas import tpu as pltpu


def _round_up(n: int, m: int) -> int:
    return ((n + m - 1) // m) * m


def _vmem_capacity_bytes() -> int:
    try:
        return int(pltpu.get_tpu_info().vmem_capacity_bytes)
    except Exception:
        return 64 * 1024 * 1024   # conservative default (v7x: 64 MiB per TC)


def _pick_batch_tile(batch: int, fd: int, vmem_cap: int) -> int:
    """Largest batch tile whose pipelined input + f32 temporaries fit VMEM comfortably."""
    row32 = fd * 4                                   # one f32 row of intermediates
    budget = min(vmem_cap, 128 * 1024 * 1024) // 2   # leave half of physical VMEM free
    # ~6x the tile covers: 2 pipelined input buffers + f32 upcast + squares + slack.
    cap = max(128, (budget // (6 * row32)) // 128 * 128)
    cap = min(cap, 8192)
    b8 = _round_up(batch, 8)
    if b8 <= cap:
        if b8 >= 256:
            # Split into >= 2 grid steps so v7x's two TensorCores both get work.
            return _round_up(-(-b8 // 2), 128)
        return b8                                    # small batch: single block
    return cap


def fm_interaction_kernel(x_ref, sel_ref, o_ref):
    # x_ref:   (tb, F*D) lane-dense input tile
    # sel_ref: (F*D, D)  constant 0/1 selector, sel[f*D + d, d] = 1
    # o_ref:   (1, tb)   lane-dense per-row output block
    hi = lax.Precision.HIGHEST
    x = x_ref[...].astype(jnp.float32)               # f32 accumulation path
    # Per-field sum over the embedding dim via selector matmul on the MXU.
    s = jnp.dot(x, sel_ref[...], precision=hi,
                preferred_element_type=jnp.float32)  # (tb, D)
    # Row-sums as MXU dots against a ones row (contract minor dims) -> (1, tb),
    # which is already lane-dense for the output store.
    dn = (((1,), (1,)), ((), ()))
    square_of_sum = lax.dot_general(
        jnp.ones((1, s.shape[1]), jnp.float32), s * s, dn,
        precision=hi, preferred_element_type=jnp.float32)      # (1, tb)
    sum_of_square = lax.dot_general(
        jnp.ones((1, x.shape[1]), jnp.float32), x * x, dn,
        precision=hi, preferred_element_type=jnp.float32)      # (1, tb)
    # 0.5 applied once, after the reductions.
    o_ref[...] = (0.5 * (square_of_sum - sum_of_square)).astype(o_ref.dtype)


def fm_interaction(x, *, tb=None):
    """Pallas FM interaction. x: (B, F, D) -> (B, 1)."""
    B, F, D = x.shape
    FD = F * D

    vmem_cap = _vmem_capacity_bytes()
    if tb is None:
        tb = _pick_batch_tile(B, FD, vmem_cap)
    else:
        tb = max(8, _round_up(int(tb), 8))
        if _round_up(B, tb) > tb:       # multi-block: keep output lane blocks 128-aligned
            tb = _round_up(tb, 128)

    b_pad = _round_up(B, tb)
    grid = (b_pad // tb,)

    # Lane-dense, contiguous (free) reshape; zero-pad ragged batches (zero rows -> 0).
    x2 = x.reshape(B, FD)
    if b_pad != B:
        x2 = jnp.pad(x2, ((0, b_pad - B), (0, 0)))

    # Constant 0/1 selector recovering the per-field sum: (x2 @ sel)[b, d] = sum_f x[b, f, d].
    sel = (jnp.arange(FD, dtype=jnp.int32)[:, None] % D
           == jnp.arange(D, dtype=jnp.int32)[None, :]).astype(jnp.float32)

    # Explicit VMEM limit: pipelined input blocks + f32 temporaries + slack,
    # capped at physical capacity (don't rely on the 16/32 MiB scoped default).
    itemsize = jnp.dtype(x.dtype).itemsize
    vmem_need = (2 * tb * FD * itemsize      # double-buffered input blocks
                 + 4 * tb * FD * 4           # f32 upcast / squares / dot temporaries
                 + 2 * FD * D * 4            # selector
                 + 4 * tb * 4                # output blocks
                 + (4 << 20))                # slack
    vmem_limit = int(min(vmem_cap, 128 << 20, max(vmem_need, 16 << 20)))

    out_row = pl.pallas_call(
        fm_interaction_kernel,
        out_shape=jax.ShapeDtypeStruct((1, b_pad), x.dtype),
        grid_spec=pltpu.PrefetchScalarGridSpec(
            num_scalar_prefetch=0,
            grid=grid,
            in_specs=[
                pl.BlockSpec((tb, FD), lambda i: (i, 0)),
                pl.BlockSpec((FD, D), lambda i: (0, 0)),   # resident across grid steps
            ],
            out_specs=pl.BlockSpec((1, tb), lambda i: (0, i)),
        ),
        compiler_params=pltpu.CompilerParams(
            dimension_semantics=("parallel",),
            vmem_limit_bytes=vmem_limit,
        ),
    )(x2, sel)

    return out_row.reshape(-1)[:B].reshape(B, 1)


def fm_interaction_ref(x):
    """Pure-JAX reference mirroring the PyTorch forward."""
    square_of_sum = jnp.sum(x, axis=1) ** 2
    sum_of_square = jnp.sum(x ** 2, axis=1)
    ix = square_of_sum - sum_of_square
    return 0.5 * jnp.sum(ix, axis=1, keepdims=True)


if __name__ == "__main__":
    key = jax.random.PRNGKey(0)
    B, F, D = 8, 8, 32  # batch, num_fields, embedding dim
    x = jax.random.normal(key, (B, F, D), dtype=jnp.float32)

    out = jax.block_until_ready(fm_interaction(x))
    ref = fm_interaction_ref(x)
    assert out.shape == (B, 1), out.shape
    assert jnp.allclose(out, ref, atol=1e-3, rtol=1e-3), (
        f"max abs err = {jnp.max(jnp.abs(out - ref))}")

    # Ragged batch (exercises zero-padding + lane-dense output slicing).
    x_r = jax.random.normal(jax.random.PRNGKey(1), (10, F, D), dtype=jnp.float32)
    out_r = jax.block_until_ready(fm_interaction(x_r))
    ref_r = fm_interaction_ref(x_r)
    assert out_r.shape == (10, 1), out_r.shape
    assert jnp.allclose(out_r, ref_r, atol=1e-3, rtol=1e-3), (
        f"max abs err = {jnp.max(jnp.abs(out_r - ref_r))}")

    print("KERNEL_OK")
</pallas_src>

<mosaic_0001>
module attributes {stable_mosaic.version = 11 : i64} {
  func.func @fm_interaction_kernel(%arg0: i32, %arg1: memref<8x256xf32, #tpu.memory_space<vmem>>, %arg2: memref<256x32xf32, #tpu.memory_space<vmem>>, %arg3: memref<1x8xf32, #tpu.memory_space<vmem>>) attributes {dimension_semantics = [#tpu.dimension_semantics<parallel>], iteration_bounds = array<i64: 1>, scalar_prefetch = 0 : i64, scratch_operands = 0 : i64, tpu.core_type = #tpu.core_type<tc>, window_params = [{transform_indices = @transform_0, window_bounds = array<i64: 8, 256>}, {pipeline_mode = #tpu.pipeline_mode<synchronous>, transform_indices = @transform_1, window_bounds = array<i64: 256, 32>}, {transform_indices = @transform_2, window_bounds = array<i64: 1, 8>}]} {
    %c0 = arith.constant 0 : index
    %c0_0 = arith.constant 0 : index
    %0 = vector.load %arg1[%c0, %c0_0] : memref<8x256xf32, #tpu.memory_space<vmem>>, vector<8x256xf32>
    %c0_1 = arith.constant 0 : index
    %c0_2 = arith.constant 0 : index
    %1 = vector.load %arg2[%c0_1, %c0_2] : memref<256x32xf32, #tpu.memory_space<vmem>>, vector<256x32xf32>
    %cst = arith.constant dense<0.000000e+00> : vector<8x32xf32>
    %2 = tpu.matmul %0, %1, %cst {dimension_numbers = #tpu.dot_dimension_numbers<[1], [0], [0], [1], [0, 0, 1, 1], [], []>, precision = #tpu.contract_precision<fp32>} : vector<8x256xf32>, vector<256x32xf32>, vector<8x32xf32> -> vector<8x32xf32>
    %cst_3 = arith.constant 1.000000e+00 : f32
    %3 = vector.broadcast %cst_3 : f32 to vector<1x32xf32>
    %4 = arith.mulf %2, %2 : vector<8x32xf32>
    %cst_4 = arith.constant dense<0.000000e+00> : vector<1x8xf32>
    %5 = tpu.matmul %3, %4, %cst_4 {dimension_numbers = #tpu.dot_dimension_numbers<[1], [1], [0], [0], [0, 0, 1, 0], [], []>, precision = #tpu.contract_precision<fp32>} : vector<1x32xf32>, vector<8x32xf32>, vector<1x8xf32> -> vector<1x8xf32>
    %cst_5 = arith.constant 1.000000e+00 : f32
    %6 = vector.broadcast %cst_5 : f32 to vector<1x256xf32>
    %7 = arith.mulf %0, %0 : vector<8x256xf32>
    %cst_6 = arith.constant dense<0.000000e+00> : vector<1x8xf32>
    %8 = tpu.matmul %6, %7, %cst_6 {dimension_numbers = #tpu.dot_dimension_numbers<[1], [1], [0], [0], [0, 0, 1, 0], [], []>, precision = #tpu.contract_precision<fp32>} : vector<1x256xf32>, vector<8x256xf32>, vector<1x8xf32> -> vector<1x8xf32>
    %9 = arith.subf %5, %8 : vector<1x8xf32>
    %cst_7 = arith.constant 5.000000e-01 : f32
    %10 = vector.broadcast %cst_7 : f32 to vector<1x8xf32>
    %11 = arith.mulf %10, %9 : vector<1x8xf32>
    %c0_8 = arith.constant 0 : index
    %c0_9 = arith.constant 0 : index
    %12 = vector.load %arg3[%c0_8, %c0_9] : memref<1x8xf32, #tpu.memory_space<vmem>>, vector<1x8xf32>
    tpu.vector_store %arg3[%c0_8, %c0_9], %11 {strides = array<i32>} : memref<1x8xf32, #tpu.memory_space<vmem>>, vector<1x8xf32>,
    return
  }
  func.func @transform_0(%arg0: i32) -> (i32, i32) {
    %c0_i32 = arith.constant 0 : i32
    %c0_i32_0 = arith.constant 0 : i32
    return %arg0, %c0_i32 : i32, i32
  }
  func.func @transform_1(%arg0: i32) -> (i32, i32) {
    %c0_i32 = arith.constant 0 : i32
    %c0_i32_0 = arith.constant 0 : i32
    %c0_i32_1 = arith.constant 0 : i32
    return %c0_i32, %c0_i32_0 : i32, i32
  }
  func.func @transform_2(%arg0: i32) -> (i32, i32) {
    %c0_i32 = arith.constant 0 : i32
    %c0_i32_0 = arith.constant 0 : i32
    return %c0_i32, %arg0 : i32, i32
  }
}

</mosaic_0001>

<llo_original>
// kernel: tpu_custom_call.1
$region0: #{tpu_custom_call.1}
  #allocation0 [shape = 'u32[]', space=smem, size = 0x4, offset = 0x4, fixed_abs, tag = 'smem constant byte address 0x4 - core index']
  #allocation1 [shape = 'u32[72,128]{1,0:T(1,128)}', space=vmem, size = 0x9000, scoped, tag = 'internal scratch']
  %s0 = inlined_call_operand.vmem [shape: f32[8,256], index: 0, kind: input, shape index: {}]
  %s1 = inlined_call_operand.vmem [shape: f32[256,32], index: 1, kind: input, shape index: {}]
  %s2 = inlined_call_operand.hbm [shape: f32[1,8], index: 2, kind: output, shape index: {}]
  %s3 = sld [smem:[#allocation0]]
  $region18: #{tpu_custom_call.1} parent=0
    _
  %s5 = ssub.s32 1, %s3
  %s6 = scalar_select 0, %s5, %s3
  $region1: #{tpu_custom_call.1} parent=0
    #allocation2 [shape = 'u8[512]{0}', space=vmem, size = 0x400, scoped, tag = 'output window, operand 0, single buffered']
    #allocation3 [shape = 's32[1]{0}', space=sflag, size = 0x4, scoped, tag = 'scoped memory for tpu_custom_call.1']
    %7 = vsyncpa [#allocation3], 0
    // Predicated region
    $region2: #{tpu_custom_call.1} parent=1 // pred_check
      _
    $region3: #{tpu_custom_call.1} parent=1 // pred_check_branch
      %9 = sbr.rel (0) target = $region5
    $region4: #{tpu_custom_call.1} parent=1 // pred_region
      _
    $region5: #{tpu_custom_call.1} parent=1 // pred_fallthru
      _
    // Predicated region
    $region6: #{tpu_custom_call.1} parent=1 // pred_check
      _
    $region7: #{tpu_custom_call.1} parent=1 // pred_check_branch
      %11 = sbr.rel (0) target = $region9
    $region8: #{tpu_custom_call.1} parent=1 // pred_region
      _
    $region9: #{tpu_custom_call.1} parent=1 // pred_fallthru
      _
    %v12 = vld [vmem:[%s0] sm:$0xff]
    %v13 = vld [vmem:[%s0 + $0x8] sm:$0xff]
    %v14 = vld [vmem:[%s1] sm:$0xff]
    %v15 = vld [vmem:[%s1 + $0x8] sm:$0xff]
    %v16 = vld [vmem:[%s1 + $0x10] sm:$0xff]
    %v17 = vld [vmem:[%s1 + $0x18] sm:$0xff]
    %v18 = vld [vmem:[%s1 + $0x20] sm:$0xff]
    %v19 = vld [vmem:[%s1 + $0x28] sm:$0xff]
    %v20 = vld [vmem:[%s1 + $0x30] sm:$0xff]
    %v21 = vld [vmem:[%s1 + $0x38] sm:$0xff]
    %v22 = vld [vmem:[%s1 + $0x40] sm:$0xff]
    %v23 = vld [vmem:[%s1 + $0x48] sm:$0xff]
    %v24 = vld [vmem:[%s1 + $0x50] sm:$0xff]
    %v25 = vld [vmem:[%s1 + $0x58] sm:$0xff]
    %v26 = vld [vmem:[%s1 + $0x60] sm:$0xff]
    %v27 = vld [vmem:[%s1 + $0x68] sm:$0xff]
    %v28 = vld [vmem:[%s1 + $0x70] sm:$0xff]
    %v29 = vld [vmem:[%s1 + $0x78] sm:$0xff]
    %v30 = vld [vmem:[%s1 + $0x80] sm:$0xff]
    %v31 = vld [vmem:[%s1 + $0x88] sm:$0xff]
    %v32 = vld [vmem:[%s1 + $0x90] sm:$0xff]
    %v33 = vld [vmem:[%s1 + $0x98] sm:$0xff]
    %v34 = vld [vmem:[%s1 + $0xa0] sm:$0xff]
    %v35 = vld [vmem:[%s1 + $0xa8] sm:$0xff]
    %v36 = vld [vmem:[%s1 + $0xb0] sm:$0xff]
    %v37 = vld [vmem:[%s1 + $0xb8] sm:$0xff]
    %v38 = vld [vmem:[%s1 + $0xc0] sm:$0xff]
    %v39 = vld [vmem:[%s1 + $0xc8] sm:$0xff]
    %v40 = vld [vmem:[%s1 + $0xd0] sm:$0xff]
    %v41 = vld [vmem:[%s1 + $0xd8] sm:$0xff]
    %v42 = vld [vmem:[%s1 + $0xe0] sm:$0xff]
    %v43 = vld [vmem:[%s1 + $0xe8] sm:$0xff]
    %v44 = vld [vmem:[%s1 + $0xf0] sm:$0xff]
    %v45 = vld [vmem:[%s1 + $0xf8] sm:$0xff]
    %v46 = vand.u32 %v29, 4294901760
    %47 = vmatpush.msra.mxu0 %v46
    %v48 = vand.u32 %v28, 4294901760
    %49 = vmatpush.msra.mxu0 %v48
    %v50 = vand.u32 %v27, 4294901760
    %51 = vmatpush.msra.mxu0 %v50
    %v52 = vand.u32 %v26, 4294901760
    %53 = vmatpush.msra.mxu0 %v52
    %v54 = vand.u32 %v25, 4294901760
    %55 = vmatpush.msra.mxu0 %v54
    %v56 = vand.u32 %v24, 4294901760
    %57 = vmatpush.msra.mxu0 %v56
    %v58 = vand.u32 %v23, 4294901760
    %59 = vmatpush.msra.mxu0 %v58
    %v60 = vand.u32 %v22, 4294901760
    %61 = vmatpush.msra.mxu0 %v60
    %v62 = vand.u32 %v21, 4294901760
    %63 = vmatpush.msra.mxu0 %v62
    %v64 = vand.u32 %v20, 4294901760
    %65 = vmatpush.msra.mxu0 %v64
    %v66 = vand.u32 %v19, 4294901760
    %67 = vmatpush.msra.mxu0 %v66
    %v68 = vand.u32 %v18, 4294901760
    %69 = vmatpush.msra.mxu0 %v68
    %v70 = vand.u32 %v17, 4294901760
    %71 = vmatpush.msra.mxu0 %v70
    %v72 = vand.u32 %v16, 4294901760
    %73 = vmatpush.msra.mxu0 %v72
    %v74 = vand.u32 %v15, 4294901760
    %75 = vmatpush.msra.mxu0 %v74
    %v76 = vand.u32 %v14, 4294901760
    %77 = vmatpush.msra.mxu0 %v76
    %v78 = vand.u32 %v12, 4294901760
    %v79 = vsub.f32 %v12, %v78
    %v80 = vand.u32 %v79, 4294901760
    %v81 = vsub.f32 %v79, %v80
    %v82 = vand.u32 %v81, 4294901760
    %83 = vmatmul.f32.gmra.mxu0 %v82
    %v84 = vpop.f32.mrf.mxu0
    %v85 = vadd.f32 0.0, %v84
    %86 = vdwg.mxu0
    %v87 = vand.u32 %v29, 4294901760
    %v88 = vsub.f32 %v29, %v87
    %v89 = vand.u32 %v88, 4294901760
    %v90 = vsub.f32 %v88, %v89
    %v91 = vand.u32 %v90, 4294901760
    %92 = vmatpush.msra.mxu0 %v91
    %v93 = vand.u32 %v28, 4294901760
    %v94 = vsub.f32 %v28, %v93
    %v95 = vand.u32 %v94, 4294901760
    %v96 = vsub.f32 %v94, %v95
    %v97 = vand.u32 %v96, 4294901760
    %98 = vmatpush.msra.mxu0 %v97
    %v99 = vand.u32 %v27, 4294901760
    %v100 = vsub.f32 %v27, %v99
    %v101 = vand.u32 %v100, 4294901760
    %v102 = vsub.f32 %v100, %v101
    %v103 = vand.u32 %v102, 4294901760
    %104 = vmatpush.msra.mxu0 %v103
    %v105 = vand.u32 %v26, 4294901760
    %v106 = vsub.f32 %v26, %v105
    %v107 = vand.u32 %v106, 4294901760
    %v108 = vsub.f32 %v106, %v107
    %v109 = vand.u32 %v108, 4294901760
    %110 = vmatpush.msra.mxu0 %v109
    %v111 = vand.u32 %v25, 4294901760
    %v112 = vsub.f32 %v25, %v111
    %v113 = vand.u32 %v112, 4294901760
    %v114 = vsub.f32 %v112, %v113
    %v115 = vand.u32 %v114, 4294901760
    %116 = vmatpush.msra.mxu0 %v115
    %v117 = vand.u32 %v24, 4294901760
    %v118 = vsub.f32 %v24, %v117
    %v119 = vand.u32 %v118, 4294901760
    %v120 = vsub.f32 %v118, %v119
    %v121 = vand.u32 %v120, 4294901760
    %122 = vmatpush.msra.mxu0 %v121
    %v123 = vand.u32 %v23, 4294901760
    %v124 = vsub.f32 %v23, %v123
    %v125 = vand.u32 %v124, 4294901760
    %v126 = vsub.f32 %v124, %v125
    %v127 = vand.u32 %v126, 4294901760
    %128 = vmatpush.msra.mxu0 %v127
    %v129 = vand.u32 %v22, 4294901760
    %v130 = vsub.f32 %v22, %v129
    %v131 = vand.u32 %v130, 4294901760
    %v132 = vsub.f32 %v130, %v131
    %v133 = vand.u32 %v132, 4294901760
    %134 = vmatpush.msra.mxu0 %v133
    %v135 = vand.u32 %v21, 4294901760
    %v136 = vsub.f32 %v21, %v135
    %v137 = vand.u32 %v136, 4294901760
    %v138 = vsub.f32 %v136, %v137
    %v139 = vand.u32 %v138, 4294901760
    %140 = vmatpush.msra.mxu0 %v139
    %v141 = vand.u32 %v20, 4294901760
    %v142 = vsub.f32 %v20, %v141
    %v143 = vand.u32 %v142, 4294901760
    %v144 = vsub.f32 %v142, %v143
    %v145 = vand.u32 %v144, 4294901760
    %146 = vmatpush.msra.mxu0 %v145
    %v147 = vand.u32 %v19, 4294901760
    %v148 = vsub.f32 %v19, %v147
    %v149 = vand.u32 %v148, 4294901760
    %v150 = vsub.f32 %v148, %v149
    %v151 = vand.u32 %v150, 4294901760
    %152 = vmatpush.msra.mxu0 %v151
    %v153 = vand.u32 %v18, 4294901760
    %v154 = vsub.f32 %v18, %v153
    %v155 = vand.u32 %v154, 4294901760
    %v156 = vsub.f32 %v154, %v155
    %v157 = vand.u32 %v156, 4294901760
    %158 = vmatpush.msra.mxu0 %v157
    %v159 = vand.u32 %v17, 4294901760
    %v160 = vsub.f32 %v17, %v159
    %v161 = vand.u32 %v160, 4294901760
    %v162 = vsub.f32 %v160, %v161
    %v163 = vand.u32 %v162, 4294901760
    %164 = vmatpush.msra.mxu0 %v163
    %v165 = vand.u32 %v16, 4294901760
    %v166 = vsub.f32 %v16, %v165
    %v167 = vand.u32 %v166, 4294901760
    %v168 = vsub.f32 %v166, %v167
    %v169 = vand.u32 %v168, 4294901760
    %170 = vmatpush.msra.mxu0 %v169
    %v171 = vand.u32 %v15, 4294901760
    %v172 = vsub.f32 %v15, %v171
    %v173 = vand.u32 %v172, 4294901760
    %v174 = vsub.f32 %v172, %v173
    %v175 = vand.u32 %v174, 4294901760
    %176 = vmatpush.msra.mxu0 %v175
    %v177 = vand.u32 %v14, 4294901760
    %v178 = vsub.f32 %v14, %v177
    %v179 = vand.u32 %v178, 4294901760
    %v180 = vsub.f32 %v178, %v179
    %v181 = vand.u32 %v180, 4294901760
    %182 = vmatpush.msra.mxu0 %v181
    %v183 = vand.u32 %v12, 4294901760
    %184 = vmatmul.f32.gmra.mxu0 %v183
    %v185 = vpop.f32.mrf.mxu0
    %v186 = vadd.f32 %v85, %v185
    %187 = vdwg.mxu0
    %v188 = vand.u32 %v29, 4294901760
    %v189 = vsub.f32 %v29, %v188
    %190 = vmatpush.msra.mxu0 %v189
    %v191 = vand.u32 %v28, 4294901760
    %v192 = vsub.f32 %v28, %v191
    %193 = vmatpush.msra.mxu0 %v192
    %v194 = vand.u32 %v27, 4294901760
    %v195 = vsub.f32 %v27, %v194
    %196 = vmatpush.msra.mxu0 %v195
    %v197 = vand.u32 %v26, 4294901760
    %v198 = vsub.f32 %v26, %v197
    %199 = vmatpush.msra.mxu0 %v198
    %v200 = vand.u32 %v25, 4294901760
    %v201 = vsub.f32 %v25, %v200
    %202 = vmatpush.msra.mxu0 %v201
    %v203 = vand.u32 %v24, 4294901760
    %v204 = vsub.f32 %v24, %v203
    %205 = vmatpush.msra.mxu0 %v204
    %v206 = vand.u32 %v23, 4294901760
    %v207 = vsub.f32 %v23, %v206
    %208 = vmatpush.msra.mxu0 %v207
    %v209 = vand.u32 %v22, 4294901760
    %v210 = vsub.f32 %v22, %v209
    %211 = vmatpush.msra.mxu0 %v210
    %v212 = vand.u32 %v21, 4294901760
    %v213 = vsub.f32 %v21, %v212
    %214 = vmatpush.msra.mxu0 %v213
    %v215 = vand.u32 %v20, 4294901760
    %v216 = vsub.f32 %v20, %v215
    %217 = vmatpush.msra.mxu0 %v216
    %v218 = vand.u32 %v19, 4294901760
    %v219 = vsub.f32 %v19, %v218
    %220 = vmatpush.msra.mxu0 %v219
    %v221 = vand.u32 %v18, 4294901760
    %v222 = vsub.f32 %v18, %v221
    %223 = vmatpush.msra.mxu0 %v222
    %v224 = vand.u32 %v17, 4294901760
    %v225 = vsub.f32 %v17, %v224
    %226 = vmatpush.msra.mxu0 %v225
    %v227 = vand.u32 %v16, 4294901760
    %v228 = vsub.f32 %v16, %v227
    %229 = vmatpush.msra.mxu0 %v228
    %v230 = vand.u32 %v15, 4294901760
    %v231 = vsub.f32 %v15, %v230
    %232 = vmatpush.msra.mxu0 %v231
    %v233 = vand.u32 %v14, 4294901760
    %v234 = vsub.f32 %v14, %v233
    %235 = vmatpush.msra.mxu0 %v234
    %v236 = vand.u32 %v12, 4294901760
    %v237 = vsub.f32 %v12, %v236
    %238 = vmatmul.f32.gmra.mxu0 %v237
    %v239 = vpop.f32.mrf.mxu0
    %v240 = vadd.f32 %v186, %v239
    %241 = vdwg.mxu0
    %v242 = vand.u32 %v29, 4294901760
    %243 = vmatpush.msra.mxu0 %v242
    %v244 = vand.u32 %v28, 4294901760
    %245 = vmatpush.msra.mxu0 %v244
    %v246 = vand.u32 %v27, 4294901760
    %247 = vmatpush.msra.mxu0 %v246
    %v248 = vand.u32 %v26, 4294901760
    %249 = vmatpush.msra.mxu0 %v248
    %v250 = vand.u32 %v25, 4294901760
    %251 = vmatpush.msra.mxu0 %v250
    %v252 = vand.u32 %v24, 4294901760
    %253 = vmatpush.msra.mxu0 %v252
    %v254 = vand.u32 %v23, 4294901760
    %255 = vmatpush.msra.mxu0 %v254
    %v256 = vand.u32 %v22, 4294901760
    %257 = vmatpush.msra.mxu0 %v256
    %v258 = vand.u32 %v21, 4294901760
    %259 = vmatpush.msra.mxu0 %v258
    %v260 = vand.u32 %v20, 4294901760
    %261 = vmatpush.msra.mxu0 %v260
    %v262 = vand.u32 %v19, 4294901760
    %263 = vmatpush.msra.mxu0 %v262
    %v264 = vand.u32 %v18, 4294901760
    %265 = vmatpush.msra.mxu0 %v264
    %v266 = vand.u32 %v17, 4294901760
    %267 = vmatpush.msra.mxu0 %v266
    %v268 = vand.u32 %v16, 4294901760
    %269 = vmatpush.msra.mxu0 %v268
    %v270 = vand.u32 %v15, 4294901760
    %271 = vmatpush.msra.mxu0 %v270
    %v272 = vand.u32 %v14, 4294901760
    %273 = vmatpush.msra.mxu0 %v272
    %v274 = vand.u32 %v12, 4294901760
    %v275 = vsub.f32 %v12, %v274
    %v276 = vand.u32 %v275, 4294901760
    %277 = vmatmul.f32.gmra.mxu0 %v276
    %v278 = vpop.f32.mrf.mxu0
    %v279 = vadd.f32 %v240, %v278
    %280 = vdwg.mxu0
    %v281 = vand.u32 %v29, 4294901760
    %v282 = vsub.f32 %v29, %v281
    %v283 = vand.u32 %v282, 4294901760
    %284 = vmatpush.msra.mxu0 %v283
    %v285 = vand.u32 %v28, 4294901760
    %v286 = vsub.f32 %v28, %v285
    %v287 = vand.u32 %v286, 4294901760
    %288 = vmatpush.msra.mxu0 %v287
    %v289 = vand.u32 %v27, 4294901760
    %v290 = vsub.f32 %v27, %v289
    %v291 = vand.u32 %v290, 4294901760
    %292 = vmatpush.msra.mxu0 %v291
    %v293 = vand.u32 %v26, 4294901760
    %v294 = vsub.f32 %v26, %v293
    %v295 = vand.u32 %v294, 4294901760
    %296 = vmatpush.msra.mxu0 %v295
    %v297 = vand.u32 %v25, 4294901760
    %v298 = vsub.f32 %v25, %v297
    %v299 = vand.u32 %v298, 4294901760
    %300 = vmatpush.msra.mxu0 %v299
    %v301 = vand.u32 %v24, 4294901760
    %v302 = vsub.f32 %v24, %v301
    %v303 = vand.u32 %v302, 4294901760
    %304 = vmatpush.msra.mxu0 %v303
    %v305 = vand.u32 %v23, 4294901760
    %v306 = vsub.f32 %v23, %v305
    %v307 = vand.u32 %v306, 4294901760
    %308 = vmatpush.msra.mxu0 %v307
    %v309 = vand.u32 %v22, 4294901760
    %v310 = vsub.f32 %v22, %v309
    %v311 = vand.u32 %v310, 4294901760
    %312 = vmatpush.msra.mxu0 %v311
    %v313 = vand.u32 %v21, 4294901760
    %v314 = vsub.f32 %v21, %v313
    %v315 = vand.u32 %v314, 4294901760
    %316 = vmatpush.msra.mxu0 %v315
    %v317 = vand.u32 %v20, 4294901760
    %v318 = vsub.f32 %v20, %v317
    %v319 = vand.u32 %v318, 4294901760
    %320 = vmatpush.msra.mxu0 %v319
    %v321 = vand.u32 %v19, 4294901760
    %v322 = vsub.f32 %v19, %v321
    %v323 = vand.u32 %v322, 4294901760
    %324 = vmatpush.msra.mxu0 %v323
    %v325 = vand.u32 %v18, 4294901760
    %v326 = vsub.f32 %v18, %v325
    %v327 = vand.u32 %v326, 4294901760
    %328 = vmatpush.msra.mxu0 %v327
    %v329 = vand.u32 %v17, 4294901760
    %v330 = vsub.f32 %v17, %v329
    %v331 = vand.u32 %v330, 4294901760
    %332 = vmatpush.msra.mxu0 %v331
    %v333 = vand.u32 %v16, 4294901760
    %v334 = vsub.f32 %v16, %v333
    %v335 = vand.u32 %v334, 4294901760
    %336 = vmatpush.msra.mxu0 %v335
    %v337 = vand.u32 %v15, 4294901760
    %v338 = vsub.f32 %v15, %v337
    %v339 = vand.u32 %v338, 4294901760
    %340 = vmatpush.msra.mxu0 %v339
    %v341 = vand.u32 %v14, 4294901760
    %v342 = vsub.f32 %v14, %v341
    %v343 = vand.u32 %v342, 4294901760
    %344 = vmatpush.msra.mxu0 %v343
    %v345 = vand.u32 %v12, 4294901760
    %346 = vmatmul.f32.gmra.mxu0 %v345
    %v347 = vpop.f32.mrf.mxu0
    %v348 = vadd.f32 %v279, %v347
    %349 = vdwg.mxu0
    %v350 = vand.u32 %v29, 4294901760
    %351 = vmatpush.msra.mxu0 %v350
    %v352 = vand.u32 %v28, 4294901760
    %353 = vmatpush.msra.mxu0 %v352
    %v354 = vand.u32 %v27, 4294901760
    %355 = vmatpush.msra.mxu0 %v354
    %v356 = vand.u32 %v26, 4294901760
    %357 = vmatpush.msra.mxu0 %v356
    %v358 = vand.u32 %v25, 4294901760
    %359 = vmatpush.msra.mxu0 %v358
    %v360 = vand.u32 %v24, 4294901760
    %361 = vmatpush.msra.mxu0 %v360
    %v362 = vand.u32 %v23, 4294901760
    %363 = vmatpush.msra.mxu0 %v362
    %v364 = vand.u32 %v22, 4294901760
    %365 = vmatpush.msra.mxu0 %v364
    %v366 = vand.u32 %v21, 4294901760
    %367 = vmatpush.msra.mxu0 %v366
    %v368 = vand.u32 %v20, 4294901760
    %369 = vmatpush.msra.mxu0 %v368
    %v370 = vand.u32 %v19, 4294901760
    %371 = vmatpush.msra.mxu0 %v370
    %v372 = vand.u32 %v18, 4294901760
    %373 = vmatpush.msra.mxu0 %v372
    %v374 = vand.u32 %v17, 4294901760
    %375 = vmatpush.msra.mxu0 %v374
    %v376 = vand.u32 %v16, 4294901760
    %377 = vmatpush.msra.mxu0 %v376
    %v378 = vand.u32 %v15, 4294901760
    %379 = vmatpush.msra.mxu0 %v378
    %v380 = vand.u32 %v14, 4294901760
    %381 = vmatpush.msra.mxu0 %v380
    %v382 = vand.u32 %v12, 4294901760
    %383 = vmatmul.f32.gmra.mxu0 %v382
    %v384 = vpop.f32.mrf.mxu0
    %v385 = vadd.f32 %v348, %v384
    %386 = vdwg.mxu0
    %v387 = vand.u32 %v45, 4294901760
    %388 = vmatpush.msra.mxu0 %v387
    %v389 = vand.u32 %v44, 4294901760
    %390 = vmatpush.msra.mxu0 %v389
    %v391 = vand.u32 %v43, 4294901760
    %392 = vmatpush.msra.mxu0 %v391
    %v393 = vand.u32 %v42, 4294901760
    %394 = vmatpush.msra.mxu0 %v393
    %v395 = vand.u32 %v41, 4294901760
    %396 = vmatpush.msra.mxu0 %v395
    %v397 = vand.u32 %v40, 4294901760
    %398 = vmatpush.msra.mxu0 %v397
    %v399 = vand.u32 %v39, 4294901760
    %400 = vmatpush.msra.mxu0 %v399
    %v401 = vand.u32 %v38, 4294901760
    %402 = vmatpush.msra.mxu0 %v401
    %v403 = vand.u32 %v37, 4294901760
    %404 = vmatpush.msra.mxu0 %v403
    %v405 = vand.u32 %v36, 4294901760
    %406 = vmatpush.msra.mxu0 %v405
    %v407 = vand.u32 %v35, 4294901760
    %408 = vmatpush.msra.mxu0 %v407
    %v409 = vand.u32 %v34, 4294901760
    %410 = vmatpush.msra.mxu0 %v409
    %v411 = vand.u32 %v33, 4294901760
    %412 = vmatpush.msra.mxu0 %v411
    %v413 = vand.u32 %v32, 4294901760
    %414 = vmatpush.msra.mxu0 %v413
    %v415 = vand.u32 %v31, 4294901760
    %416 = vmatpush.msra.mxu0 %v415
    %v417 = vand.u32 %v30, 4294901760
    %418 = vmatpush.msra.mxu0 %v417
    %v419 = vand.u32 %v13, 4294901760
    %v420 = vsub.f32 %v13, %v419
    %v421 = vand.u32 %v420, 4294901760
    %v422 = vsub.f32 %v420, %v421
    %v423 = vand.u32 %v422, 4294901760
    %424 = vmatmul.f32.gmra.mxu0 %v423
    %v425 = vpop.f32.mrf.mxu0
    %v426 = vadd.f32 %v385, %v425
    %427 = vdwg.mxu0
    %v428 = vand.u32 %v45, 4294901760
    %v429 = vsub.f32 %v45, %v428
    %v430 = vand.u32 %v429, 4294901760
    %v431 = vsub.f32 %v429, %v430
    %v432 = vand.u32 %v431, 4294901760
    %433 = vmatpush.msra.mxu0 %v432
    %v434 = vand.u32 %v44, 4294901760
    %v435 = vsub.f32 %v44, %v434
    %v436 = vand.u32 %v435, 4294901760
    %v437 = vsub.f32 %v435, %v436
    %v438 = vand.u32 %v437, 4294901760
    %439 = vmatpush.msra.mxu0 %v438
    %v440 = vand.u32 %v43, 4294901760
    %v441 = vsub.f32 %v43, %v440
    %v442 = vand.u32 %v441, 4294901760
    %v443 = vsub.f32 %v441, %v442
    %v444 = vand.u32 %v443, 4294901760
    %445 = vmatpush.msra.mxu0 %v444
    %v446 = vand.u32 %v42, 4294901760
    %v447 = vsub.f32 %v42, %v446
    %v448 = vand.u32 %v447, 4294901760
    %v449 = vsub.f32 %v447, %v448
    %v450 = vand.u32 %v449, 4294901760
    %451 = vmatpush.msra.mxu0 %v450
    %v452 = vand.u32 %v41, 4294901760
    %v453 = vsub.f32 %v41, %v452
    %v454 = vand.u32 %v453, 4294901760
    %v455 = vsub.f32 %v453, %v454
    %v456 = vand.u32 %v455, 4294901760
    %457 = vmatpush.msra.mxu0 %v456
    %v458 = vand.u32 %v40, 4294901760
    %v459 = vsub.f32 %v40, %v458
    %v460 = vand.u32 %v459, 4294901760
    %v461 = vsub.f32 %v459, %v460
    %v462 = vand.u32 %v461, 4294901760
    %463 = vmatpush.msra.mxu0 %v462
    %v464 = vand.u32 %v39, 4294901760
    %v465 = vsub.f32 %v39, %v464
    %v466 = vand.u32 %v465, 4294901760
    %v467 = vsub.f32 %v465, %v466
    %v468 = vand.u32 %v467, 4294901760
    %469 = vmatpush.msra.mxu0 %v468
    %v470 = vand.u32 %v38, 4294901760
    %v471 = vsub.f32 %v38, %v470
    %v472 = vand.u32 %v471, 4294901760
    %v473 = vsub.f32 %v471, %v472
    %v474 = vand.u32 %v473, 4294901760
    %475 = vmatpush.msra.mxu0 %v474
    %v476 = vand.u32 %v37, 4294901760
    %v477 = vsub.f32 %v37, %v476
    %v478 = vand.u32 %v477, 4294901760
    %v479 = vsub.f32 %v477, %v478
    %v480 = vand.u32 %v479, 4294901760
    %481 = vmatpush.msra.mxu0 %v480
    %v482 = vand.u32 %v36, 4294901760
    %v483 = vsub.f32 %v36, %v482
    %v484 = vand.u32 %v483, 4294901760
    %v485 = vsub.f32 %v483, %v484
    %v486 = vand.u32 %v485, 4294901760
    %487 = vmatpush.msra.mxu0 %v486
    %v488 = vand.u32 %v35, 4294901760
    %v489 = vsub.f32 %v35, %v488
    %v490 = vand.u32 %v489, 4294901760
    %v491 = vsub.f32 %v489, %v490
    %v492 = vand.u32 %v491, 4294901760
    %493 = vmatpush.msra.mxu0 %v492
    %v494 = vand.u32 %v34, 4294901760
    %v495 = vsub.f32 %v34, %v494
    %v496 = vand.u32 %v495, 4294901760
    %v497 = vsub.f32 %v495, %v496
    %v498 = vand.u32 %v497, 4294901760
    %499 = vmatpush.msra.mxu0 %v498
    %v500 = vand.u32 %v33, 4294901760
    %v501 = vsub.f32 %v33, %v500
    %v502 = vand.u32 %v501, 4294901760
    %v503 = vsub.f32 %v501, %v502
    %v504 = vand.u32 %v503, 4294901760
    %505 = vmatpush.msra.mxu0 %v504
    %v506 = vand.u32 %v32, 4294901760
    %v507 = vsub.f32 %v32, %v506
    %v508 = vand.u32 %v507, 4294901760
    %v509 = vsub.f32 %v507, %v508
    %v510 = vand.u32 %v509, 4294901760
    %511 = vmatpush.msra.mxu0 %v510
    %v512 = vand.u32 %v31, 4294901760
    %v513 = vsub.f32 %v31, %v512
    %v514 = vand.u32 %v513, 4294901760
    %v515 = vsub.f32 %v513, %v514
    %v516 = vand.u32 %v515, 4294901760
    %517 = vmatpush.msra.mxu0 %v516
    %v518 = vand.u32 %v30, 4294901760
    %v519 = vsub.f32 %v30, %v518
    %v520 = vand.u32 %v519, 4294901760
    %v521 = vsub.f32 %v519, %v520
    %v522 = vand.u32 %v521, 4294901760
    %523 = vmatpush.msra.mxu0 %v522
    %v524 = vand.u32 %v13, 4294901760
    %525 = vmatmul.f32.gmra.mxu0 %v524
    %v526 = vpop.f32.mrf.mxu0
    %v527 = vadd.f32 %v426, %v526
    %528 = vdwg.mxu0
    %v529 = vand.u32 %v45, 4294901760
    %v530 = vsub.f32 %v45, %v529
    %531 = vmatpush.msra.mxu0 %v530
    %v532 = vand.u32 %v44, 4294901760
    %v533 = vsub.f32 %v44, %v532
    %534 = vmatpush.msra.mxu0 %v533
    %v535 = vand.u32 %v43, 4294901760
    %v536 = vsub.f32 %v43, %v535
    %537 = vmatpush.msra.mxu0 %v536
    %v538 = vand.u32 %v42, 4294901760
    %v539 = vsub.f32 %v42, %v538
    %540 = vmatpush.msra.mxu0 %v539
    %v541 = vand.u32 %v41, 4294901760
    %v542 = vsub.f32 %v41, %v541
    %543 = vmatpush.msra.mxu0 %v542
    %v544 = vand.u32 %v40, 4294901760
    %v545 = vsub.f32 %v40, %v544
    %546 = vmatpush.msra.mxu0 %v545
    %v547 = vand.u32 %v39, 4294901760
    %v548 = vsub.f32 %v39, %v547
    %549 = vmatpush.msra.mxu0 %v548
    %v550 = vand.u32 %v38, 4294901760
    %v551 = vsub.f32 %v38, %v550
    %552 = vmatpush.msra.mxu0 %v551
    %v553 = vand.u32 %v37, 4294901760
    %v554 = vsub.f32 %v37, %v553
    %555 = vmatpush.msra.mxu0 %v554
    %v556 = vand.u32 %v36, 4294901760
    %v557 = vsub.f32 %v36, %v556
    %558 = vmatpush.msra.mxu0 %v557
    %v559 = vand.u32 %v35, 4294901760
    %v560 = vsub.f32 %v35, %v559
    %561 = vmatpush.msra.mxu0 %v560
    %v562 = vand.u32 %v34, 4294901760
    %v563 = vsub.f32 %v34, %v562
    %564 = vmatpush.msra.mxu0 %v563
    %v565 = vand.u32 %v33, 4294901760
    %v566 = vsub.f32 %v33, %v565
    %567 = vmatpush.msra.mxu0 %v566
    %v568 = vand.u32 %v32, 4294901760
    %v569 = vsub.f32 %v32, %v568
    %570 = vmatpush.msra.mxu0 %v569
    %v571 = vand.u32 %v31, 4294901760
    %v572 = vsub.f32 %v31, %v571
    %573 = vmatpush.msra.mxu0 %v572
    %v574 = vand.u32 %v30, 4294901760
    %v575 = vsub.f32 %v30, %v574
    %576 = vmatpush.msra.mxu0 %v575
    %v577 = vand.u32 %v13, 4294901760
    %v578 = vsub.f32 %v13, %v577
    %579 = vmatmul.f32.gmra.mxu0 %v578
    %v580 = vpop.f32.mrf.mxu0
    %v581 = vadd.f32 %v527, %v580
    %582 = vdwg.mxu0
    %v583 = vand.u32 %v45, 4294901760
    %584 = vmatpush.msra.mxu0 %v583
    %v585 = vand.u32 %v44, 4294901760
    %586 = vmatpush.msra.mxu0 %v585
    %v587 = vand.u32 %v43, 4294901760
    %588 = vmatpush.msra.mxu0 %v587
    %v589 = vand.u32 %v42, 4294901760
    %590 = vmatpush.msra.mxu0 %v589
    %v591 = vand.u32 %v41, 4294901760
    %592 = vmatpush.msra.mxu0 %v591
    %v593 = vand.u32 %v40, 4294901760
    %594 = vmatpush.msra.mxu0 %v593
    %v595 = vand.u32 %v39, 4294901760
    %596 = vmatpush.msra.mxu0 %v595
    %v597 = vand.u32 %v38, 4294901760
    %598 = vmatpush.msra.mxu0 %v597
    %v599 = vand.u32 %v37, 4294901760
    %600 = vmatpush.msra.mxu0 %v599
    %v601 = vand.u32 %v36, 4294901760
    %602 = vmatpush.msra.mxu0 %v601
    %v603 = vand.u32 %v35, 4294901760
    %604 = vmatpush.msra.mxu0 %v603
    %v605 = vand.u32 %v34, 4294901760
    %606 = vmatpush.msra.mxu0 %v605
    %v607 = vand.u32 %v33, 4294901760
    %608 = vmatpush.msra.mxu0 %v607
    %v609 = vand.u32 %v32, 4294901760
    %610 = vmatpush.msra.mxu0 %v609
    %v611 = vand.u32 %v31, 4294901760
    %612 = vmatpush.msra.mxu0 %v611
    %v613 = vand.u32 %v30, 4294901760
    %614 = vmatpush.msra.mxu0 %v613
    %v615 = vand.u32 %v13, 4294901760
    %v616 = vsub.f32 %v13, %v615
    %v617 = vand.u32 %v616, 4294901760
    %618 = vmatmul.f32.gmra.mxu0 %v617
    %v619 = vpop.f32.mrf.mxu0
    %v620 = vadd.f32 %v581, %v619
    %621 = vdwg.mxu0
    %v622 = vand.u32 %v45, 4294901760
    %v623 = vsub.f32 %v45, %v622
    %v624 = vand.u32 %v623, 4294901760
    %625 = vmatpush.msra.mxu0 %v624
    %v626 = vand.u32 %v44, 4294901760
    %v627 = vsub.f32 %v44, %v626
    %v628 = vand.u32 %v627, 4294901760
    %629 = vmatpush.msra.mxu0 %v628
    %v630 = vand.u32 %v43, 4294901760
    %v631 = vsub.f32 %v43, %v630
    %v632 = vand.u32 %v631, 4294901760
    %633 = vmatpush.msra.mxu0 %v632
    %v634 = vand.u32 %v42, 4294901760
    %v635 = vsub.f32 %v42, %v634
    %v636 = vand.u32 %v635, 4294901760
    %637 = vmatpush.msra.mxu0 %v636
    %v638 = vand.u32 %v41, 4294901760
    %v639 = vsub.f32 %v41, %v638
    %v640 = vand.u32 %v639, 4294901760
    %641 = vmatpush.msra.mxu0 %v640
    %v642 = vand.u32 %v40, 4294901760
    %v643 = vsub.f32 %v40, %v642
    %v644 = vand.u32 %v643, 4294901760
    %645 = vmatpush.msra.mxu0 %v644
    %v646 = vand.u32 %v39, 4294901760
    %v647 = vsub.f32 %v39, %v646
    %v648 = vand.u32 %v647, 4294901760
    %649 = vmatpush.msra.mxu0 %v648
    %v650 = vand.u32 %v38, 4294901760
    %v651 = vsub.f32 %v38, %v650
    %v652 = vand.u32 %v651, 4294901760
    %653 = vmatpush.msra.mxu0 %v652
    %v654 = vand.u32 %v37, 4294901760
    %v655 = vsub.f32 %v37, %v654
    %v656 = vand.u32 %v655, 4294901760
    %657 = vmatpush.msra.mxu0 %v656
    %v658 = vand.u32 %v36, 4294901760
    %v659 = vsub.f32 %v36, %v658
    %v660 = vand.u32 %v659, 4294901760
    %661 = vmatpush.msra.mxu0 %v660
    %v662 = vand.u32 %v35, 4294901760
    %v663 = vsub.f32 %v35, %v662
    %v664 = vand.u32 %v663, 4294901760
    %665 = vmatpush.msra.mxu0 %v664
    %v666 = vand.u32 %v34, 4294901760
    %v667 = vsub.f32 %v34, %v666
    %v668 = vand.u32 %v667, 4294901760
    %669 = vmatpush.msra.mxu0 %v668
    %v670 = vand.u32 %v33, 4294901760
    %v671 = vsub.f32 %v33, %v670
    %v672 = vand.u32 %v671, 4294901760
    %673 = vmatpush.msra.mxu0 %v672
    %v674 = vand.u32 %v32, 4294901760
    %v675 = vsub.f32 %v32, %v674
    %v676 = vand.u32 %v675, 4294901760
    %677 = vmatpush.msra.mxu0 %v676
    %v678 = vand.u32 %v31, 4294901760
    %v679 = vsub.f32 %v31, %v678
    %v680 = vand.u32 %v679, 4294901760
    %681 = vmatpush.msra.mxu0 %v680
    %v682 = vand.u32 %v30, 4294901760
    %v683 = vsub.f32 %v30, %v682
    %v684 = vand.u32 %v683, 4294901760
    %685 = vmatpush.msra.mxu0 %v684
    %v686 = vand.u32 %v13, 4294901760
    %687 = vmatmul.f32.gmra.mxu0 %v686
    %v688 = vpop.f32.mrf.mxu0
    %v689 = vadd.f32 %v620, %v688
    %690 = vdwg.mxu0
    %v691 = vand.u32 %v45, 4294901760
    %692 = vmatpush.msra.mxu0 %v691
    %v693 = vand.u32 %v44, 4294901760
    %694 = vmatpush.msra.mxu0 %v693
    %v695 = vand.u32 %v43, 4294901760
    %696 = vmatpush.msra.mxu0 %v695
    %v697 = vand.u32 %v42, 4294901760
    %698 = vmatpush.msra.mxu0 %v697
    %v699 = vand.u32 %v41, 4294901760
    %700 = vmatpush.msra.mxu0 %v699
    %v701 = vand.u32 %v40, 4294901760
    %702 = vmatpush.msra.mxu0 %v701
    %v703 = vand.u32 %v39, 4294901760
    %704 = vmatpush.msra.mxu0 %v703
    %v705 = vand.u32 %v38, 4294901760
    %706 = vmatpush.msra.mxu0 %v705
    %v707 = vand.u32 %v37, 4294901760
    %708 = vmatpush.msra.mxu0 %v707
    %v709 = vand.u32 %v36, 4294901760
    %710 = vmatpush.msra.mxu0 %v709
    %v711 = vand.u32 %v35, 4294901760
    %712 = vmatpush.msra.mxu0 %v711
    %v713 = vand.u32 %v34, 4294901760
    %714 = vmatpush.msra.mxu0 %v713
    %v715 = vand.u32 %v33, 4294901760
    %716 = vmatpush.msra.mxu0 %v715
    %v717 = vand.u32 %v32, 4294901760
    %718 = vmatpush.msra.mxu0 %v717
    %v719 = vand.u32 %v31, 4294901760
    %720 = vmatpush.msra.mxu0 %v719
    %v721 = vand.u32 %v30, 4294901760
    %722 = vmatpush.msra.mxu0 %v721
    %v723 = vand.u32 %v13, 4294901760
    %724 = vmatmul.f32.gmra.mxu0 %v723
    %v725 = vpop.f32.mrf.mxu0
    %v726 = vadd.f32 %v689, %v725
    %727 = vdwg.mxu0
    %v728 = vmul.f32 %v726, %v726
    %vm729 = vcmask 261120
    %v731 = vsel %vm729, 1.0, 0
    %v734 = vsel %vm729, %v728, 0
    %736 = vmatpush.xpose.msra.mxu0 0.0
    %737 = vmatpush.xpose.msra.mxu0 0.0
    %738 = vmatpush.xpose.msra.mxu0 0.0
    %739 = vmatpush.xpose.msra.mxu0 0.0
    %740 = vmatpush.xpose.msra.mxu0 0.0
    %741 = vmatpush.xpose.msra.mxu0 0.0
    %742 = vmatpush.xpose.msra.mxu0 0.0
    %743 = vmatpush.xpose.msra.mxu0 0.0
    %744 = vmatpush.xpose.msra.mxu0 0.0
    %745 = vmatpush.xpose.msra.mxu0 0.0
    %746 = vmatpush.xpose.msra.mxu0 0.0
    %747 = vmatpush.xpose.msra.mxu0 0.0
    %748 = vmatpush.xpose.msra.mxu0 0.0
    %749 = vmatpush.xpose.msra.mxu0 0.0
    %750 = vmatpush.xpose.msra.mxu0 0.0
    %v751 = vand.u32 %v734, 4294901760
    %752 = vmatpush.xpose.msra.mxu0 %v751
    %v753 = vand.u32 %v731, 4294901760
    %v754 = vsub.f32 %v731, %v753
    %v755 = vand.u32 %v754, 4294901760
    %v756 = vsub.f32 %v754, %v755
    %v757 = vand.u32 %v756, 4294901760
    %758 = vmatmul.f32.gmra.mxu0 %v757
    %v759 = vpop.f32.mrf.mxu0
    %v760 = vadd.f32 0.0, %v759
    %761 = vdwg.mxu0
    %762 = vmatpush.xpose.msra.mxu0 0.0
    %763 = vmatpush.xpose.msra.mxu0 0.0
    %764 = vmatpush.xpose.msra.mxu0 0.0
    %765 = vmatpush.xpose.msra.mxu0 0.0
    %766 = vmatpush.xpose.msra.mxu0 0.0
    %767 = vmatpush.xpose.msra.mxu0 0.0
    %768 = vmatpush.xpose.msra.mxu0 0.0
    %769 = vmatpush.xpose.msra.mxu0 0.0
    %770 = vmatpush.xpose.msra.mxu0 0.0
    %771 = vmatpush.xpose.msra.mxu0 0.0
    %772 = vmatpush.xpose.msra.mxu0 0.0
    %773 = vmatpush.xpose.msra.mxu0 0.0
    %774 = vmatpush.xpose.msra.mxu0 0.0
    %775 = vmatpush.xpose.msra.mxu0 0.0
    %776 = vmatpush.xpose.msra.mxu0 0.0
    %v777 = vand.u32 %v734, 4294901760
    %v778 = vsub.f32 %v734, %v777
    %v779 = vand.u32 %v778, 4294901760
    %v780 = vsub.f32 %v778, %v779
    %v781 = vand.u32 %v780, 4294901760
    %782 = vmatpush.xpose.msra.mxu0 %v781
    %v783 = vand.u32 %v731, 4294901760
    %784 = vmatmul.f32.gmra.mxu0 %v783
    %v785 = vpop.f32.mrf.mxu0
    %v786 = vadd.f32 %v760, %v785
    %787 = vdwg.mxu0
    %788 = vmatpush.xpose.msra.mxu0 0.0
    %789 = vmatpush.xpose.msra.mxu0 0.0
    %790 = vmatpush.xpose.msra.mxu0 0.0
    %791 = vmatpush.xpose.msra.mxu0 0.0
    %792 = vmatpush.xpose.msra.mxu0 0.0
    %793 = vmatpush.xpose.msra.mxu0 0.0
    %794 = vmatpush.xpose.msra.mxu0 0.0
    %795 = vmatpush.xpose.msra.mxu0 0.0
    %796 = vmatpush.xpose.msra.mxu0 0.0
    %797 = vmatpush.xpose.msra.mxu0 0.0
    %798 = vmatpush.xpose.msra.mxu0 0.0
    %799 = vmatpush.xpose.msra.mxu0 0.0
    %800 = vmatpush.xpose.msra.mxu0 0.0
    %801 = vmatpush.xpose.msra.mxu0 0.0
    %802 = vmatpush.xpose.msra.mxu0 0.0
    %v803 = vand.u32 %v734, 4294901760
    %v804 = vsub.f32 %v734, %v803
    %805 = vmatpush.xpose.msra.mxu0 %v804
    %v806 = vand.u32 %v731, 4294901760
    %v807 = vsub.f32 %v731, %v806
    %808 = vmatmul.f32.gmra.mxu0 %v807
    %v809 = vpop.f32.mrf.mxu0
    %v810 = vadd.f32 %v786, %v809
    %811 = vdwg.mxu0
    %812 = vmatpush.xpose.msra.mxu0 0.0
    %813 = vmatpush.xpose.msra.mxu0 0.0
    %814 = vmatpush.xpose.msra.mxu0 0.0
    %815 = vmatpush.xpose.msra.mxu0 0.0
    %816 = vmatpush.xpose.msra.mxu0 0.0
    %817 = vmatpush.xpose.msra.mxu0 0.0
    %818 = vmatpush.xpose.msra.mxu0 0.0
    %819 = vmatpush.xpose.msra.mxu0 0.0
    %820 = vmatpush.xpose.msra.mxu0 0.0
    %821 = vmatpush.xpose.msra.mxu0 0.0
    %822 = vmatpush.xpose.msra.mxu0 0.0
    %823 = vmatpush.xpose.msra.mxu0 0.0
    %824 = vmatpush.xpose.msra.mxu0 0.0
    %825 = vmatpush.xpose.msra.mxu0 0.0
    %826 = vmatpush.xpose.msra.mxu0 0.0
    %v827 = vand.u32 %v734, 4294901760
    %828 = vmatpush.xpose.msra.mxu0 %v827
    %v829 = vand.u32 %v731, 4294901760
    %v830 = vsub.f32 %v731, %v829
    %v831 = vand.u32 %v830, 4294901760
    %832 = vmatmul.f32.gmra.mxu0 %v831
    %v833 = vpop.f32.mrf.mxu0
    %v834 = vadd.f32 %v810, %v833
    %835 = vdwg.mxu0
    %836 = vmatpush.xpose.msra.mxu0 0.0
    %837 = vmatpush.xpose.msra.mxu0 0.0
    %838 = vmatpush.xpose.msra.mxu0 0.0
    %839 = vmatpush.xpose.msra.mxu0 0.0
    %840 = vmatpush.xpose.msra.mxu0 0.0
    %841 = vmatpush.xpose.msra.mxu0 0.0
    %842 = vmatpush.xpose.msra.mxu0 0.0
    %843 = vmatpush.xpose.msra.mxu0 0.0
    %844 = vmatpush.xpose.msra.mxu0 0.0
    %845 = vmatpush.xpose.msra.mxu0 0.0
    %846 = vmatpush.xpose.msra.mxu0 0.0
    %847 = vmatpush.xpose.msra.mxu0 0.0
    %848 = vmatpush.xpose.msra.mxu0 0.0
    %849 = vmatpush.xpose.msra.mxu0 0.0
    %850 = vmatpush.xpose.msra.mxu0 0.0
    %v851 = vand.u32 %v734, 4294901760
    %v852 = vsub.f32 %v734, %v851
    %v853 = vand.u32 %v852, 4294901760
    %854 = vmatpush.xpose.msra.mxu0 %v853
    %v855 = vand.u32 %v731, 4294901760
    %856 = vmatmul.f32.gmra.mxu0 %v855
    %v857 = vpop.f32.mrf.mxu0
    %v858 = vadd.f32 %v834, %v857
    %859 = vdwg.mxu0
    %860 = vmatpush.xpose.msra.mxu0 0.0
    %861 = vmatpush.xpose.msra.mxu0 0.0
    %862 = vmatpush.xpose.msra.mxu0 0.0
    %863 = vmatpush.xpose.msra.mxu0 0.0
    %864 = vmatpush.xpose.msra.mxu0 0.0
    %865 = vmatpush.xpose.msra.mxu0 0.0
    %866 = vmatpush.xpose.msra.mxu0 0.0
    %867 = vmatpush.xpose.msra.mxu0 0.0
    %868 = vmatpush.xpose.msra.mxu0 0.0
    %869 = vmatpush.xpose.msra.mxu0 0.0
    %870 = vmatpush.xpose.msra.mxu0 0.0
    %871 = vmatpush.xpose.msra.mxu0 0.0
    %872 = vmatpush.xpose.msra.mxu0 0.0
    %873 = vmatpush.xpose.msra.mxu0 0.0
    %874 = vmatpush.xpose.msra.mxu0 0.0
    %v875 = vand.u32 %v734, 4294901760
    %876 = vmatpush.xpose.msra.mxu0 %v875
    %v877 = vand.u32 %v731, 4294901760
    %878 = vmatmul.f32.gmra.mxu0 %v877
    %v879 = vpop.f32.mrf.mxu0
    %v880 = vadd.f32 %v858, %v879
    %881 = vdwg.mxu0
    %v882 = vmul.f32 %v12, %v12
    %v883 = vmul.f32 %v13, %v13
    %884 = vmatpush.xpose.msra.mxu0 0.0
    %885 = vmatpush.xpose.msra.mxu0 0.0
    %886 = vmatpush.xpose.msra.mxu0 0.0
    %887 = vmatpush.xpose.msra.mxu0 0.0
    %888 = vmatpush.xpose.msra.mxu0 0.0
    %889 = vmatpush.xpose.msra.mxu0 0.0
    %890 = vmatpush.xpose.msra.mxu0 0.0
    %891 = vmatpush.xpose.msra.mxu0 0.0
    %892 = vmatpush.xpose.msra.mxu0 0.0
    %893 = vmatpush.xpose.msra.mxu0 0.0
    %894 = vmatpush.xpose.msra.mxu0 0.0
    %895 = vmatpush.xpose.msra.mxu0 0.0
    %896 = vmatpush.xpose.msra.mxu0 0.0
    %897 = vmatpush.xpose.msra.mxu0 0.0
    %898 = vmatpush.xpose.msra.mxu0 0.0
    %v899 = vand.u32 %v882, 4294901760
    %900 = vmatpush.xpose.msra.mxu0 %v899
    %901 = vmatmul.f32.gmra.mxu0 0.0
    %v902 = vpop.f32.mrf.mxu0
    %v903 = vadd.f32 0.0, %v902
    %904 = vdwg.mxu0
    %905 = vmatpush.xpose.msra.mxu0 0.0
    %906 = vmatpush.xpose.msra.mxu0 0.0
    %907 = vmatpush.xpose.msra.mxu0 0.0
    %908 = vmatpush.xpose.msra.mxu0 0.0
    %909 = vmatpush.xpose.msra.mxu0 0.0
    %910 = vmatpush.xpose.msra.mxu0 0.0
    %911 = vmatpush.xpose.msra.mxu0 0.0
    %912 = vmatpush.xpose.msra.mxu0 0.0
    %913 = vmatpush.xpose.msra.mxu0 0.0
    %914 = vmatpush.xpose.msra.mxu0 0.0
    %915 = vmatpush.xpose.msra.mxu0 0.0
    %916 = vmatpush.xpose.msra.mxu0 0.0
    %917 = vmatpush.xpose.msra.mxu0 0.0
    %918 = vmatpush.xpose.msra.mxu0 0.0
    %919 = vmatpush.xpose.msra.mxu0 0.0
    %v920 = vand.u32 %v882, 4294901760
    %v921 = vsub.f32 %v882, %v920
    %v922 = vand.u32 %v921, 4294901760
    %v923 = vsub.f32 %v921, %v922
    %v924 = vand.u32 %v923, 4294901760
    %925 = vmatpush.xpose.msra.mxu0 %v924
    %926 = vmatmul.f32.gmra.mxu0 1.0
    %v927 = vpop.f32.mrf.mxu0
    %v928 = vadd.f32 %v903, %v927
    %929 = vdwg.mxu0
    %930 = vmatpush.xpose.msra.mxu0 0.0
    %931 = vmatpush.xpose.msra.mxu0 0.0
    %932 = vmatpush.xpose.msra.mxu0 0.0
    %933 = vmatpush.xpose.msra.mxu0 0.0
    %934 = vmatpush.xpose.msra.mxu0 0.0
    %935 = vmatpush.xpose.msra.mxu0 0.0
    %936 = vmatpush.xpose.msra.mxu0 0.0
    %937 = vmatpush.xpose.msra.mxu0 0.0
    %938 = vmatpush.xpose.msra.mxu0 0.0
    %939 = vmatpush.xpose.msra.mxu0 0.0
    %940 = vmatpush.xpose.msra.mxu0 0.0
    %941 = vmatpush.xpose.msra.mxu0 0.0
    %942 = vmatpush.xpose.msra.mxu0 0.0
    %943 = vmatpush.xpose.msra.mxu0 0.0
    %944 = vmatpush.xpose.msra.mxu0 0.0
    %v945 = vand.u32 %v882, 4294901760
    %v946 = vsub.f32 %v882, %v945
    %947 = vmatpush.xpose.msra.mxu0 %v946
    %948 = vmatmul.f32.gmra.mxu0 0.0
    %v949 = vpop.f32.mrf.mxu0
    %v950 = vadd.f32 %v928, %v949
    %951 = vdwg.mxu0
    %952 = vmatpush.xpose.msra.mxu0 0.0
    %953 = vmatpush.xpose.msra.mxu0 0.0
    %954 = vmatpush.xpose.msra.mxu0 0.0
    %955 = vmatpush.xpose.msra.mxu0 0.0
    %956 = vmatpush.xpose.msra.mxu0 0.0
    %957 = vmatpush.xpose.msra.mxu0 0.0
    %958 = vmatpush.xpose.msra.mxu0 0.0
    %959 = vmatpush.xpose.msra.mxu0 0.0
    %960 = vmatpush.xpose.msra.mxu0 0.0
    %961 = vmatpush.xpose.msra.mxu0 0.0
    %962 = vmatpush.xpose.msra.mxu0 0.0
    %963 = vmatpush.xpose.msra.mxu0 0.0
    %964 = vmatpush.xpose.msra.mxu0 0.0
    %965 = vmatpush.xpose.msra.mxu0 0.0
    %966 = vmatpush.xpose.msra.mxu0 0.0
    %v967 = vand.u32 %v882, 4294901760
    %968 = vmatpush.xpose.msra.mxu0 %v967
    %969 = vmatmul.f32.gmra.mxu0 0.0
    %v970 = vpop.f32.mrf.mxu0
    %v971 = vadd.f32 %v950, %v970
    %972 = vdwg.mxu0
    %973 = vmatpush.xpose.msra.mxu0 0.0
    %974 = vmatpush.xpose.msra.mxu0 0.0
    %975 = vmatpush.xpose.msra.mxu0 0.0
    %976 = vmatpush.xpose.msra.mxu0 0.0
    %977 = vmatpush.xpose.msra.mxu0 0.0
    %978 = vmatpush.xpose.msra.mxu0 0.0
    %979 = vmatpush.xpose.msra.mxu0 0.0
    %980 = vmatpush.xpose.msra.mxu0 0.0
    %981 = vmatpush.xpose.msra.mxu0 0.0
    %982 = vmatpush.xpose.msra.mxu0 0.0
    %983 = vmatpush.xpose.msra.mxu0 0.0
    %984 = vmatpush.xpose.msra.mxu0 0.0
    %985 = vmatpush.xpose.msra.mxu0 0.0
    %986 = vmatpush.xpose.msra.mxu0 0.0
    %987 = vmatpush.xpose.msra.mxu0 0.0
    %v988 = vand.u32 %v882, 4294901760
    %v989 = vsub.f32 %v882, %v988
    %v990 = vand.u32 %v989, 4294901760
    %991 = vmatpush.xpose.msra.mxu0 %v990
    %992 = vmatmul.f32.gmra.mxu0 1.0
    %v993 = vpop.f32.mrf.mxu0
    %v994 = vadd.f32 %v971, %v993
    %995 = vdwg.mxu0
    %996 = vmatpush.xpose.msra.mxu0 0.0
    %997 = vmatpush.xpose.msra.mxu0 0.0
    %998 = vmatpush.xpose.msra.mxu0 0.0
    %999 = vmatpush.xpose.msra.mxu0 0.0
    %1000 = vmatpush.xpose.msra.mxu0 0.0
    %1001 = vmatpush.xpose.msra.mxu0 0.0
    %1002 = vmatpush.xpose.msra.mxu0 0.0
    %1003 = vmatpush.xpose.msra.mxu0 0.0
    %1004 = vmatpush.xpose.msra.mxu0 0.0
    %1005 = vmatpush.xpose.msra.mxu0 0.0
    %1006 = vmatpush.xpose.msra.mxu0 0.0
    %1007 = vmatpush.xpose.msra.mxu0 0.0
    %1008 = vmatpush.xpose.msra.mxu0 0.0
    %1009 = vmatpush.xpose.msra.mxu0 0.0
    %1010 = vmatpush.xpose.msra.mxu0 0.0
    %v1011 = vand.u32 %v882, 4294901760
    %1012 = vmatpush.xpose.msra.mxu0 %v1011
    %1013 = vmatmul.f32.gmra.mxu0 1.0
    %v1014 = vpop.f32.mrf.mxu0
    %v1015 = vadd.f32 %v994, %v1014
    %1016 = vdwg.mxu0
    %1017 = vmatpush.xpose.msra.mxu0 0.0
    %1018 = vmatpush.xpose.msra.mxu0 0.0
    %1019 = vmatpush.xpose.msra.mxu0 0.0
    %1020 = vmatpush.xpose.msra.mxu0 0.0
    %1021 = vmatpush.xpose.msra.mxu0 0.0
    %1022 = vmatpush.xpose.msra.mxu0 0.0
    %1023 = vmatpush.xpose.msra.mxu0 0.0
    %1024 = vmatpush.xpose.msra.mxu0 0.0
    %1025 = vmatpush.xpose.msra.mxu0 0.0
    %1026 = vmatpush.xpose.msra.mxu0 0.0
    %1027 = vmatpush.xpose.msra.mxu0 0.0
    %1028 = vmatpush.xpose.msra.mxu0 0.0
    %1029 = vmatpush.xpose.msra.mxu0 0.0
    %1030 = vmatpush.xpose.msra.mxu0 0.0
    %1031 = vmatpush.xpose.msra.mxu0 0.0
    %v1032 = vand.u32 %v883, 4294901760
    %1033 = vmatpush.xpose.msra.mxu0 %v1032
    %1034 = vmatmul.f32.gmra.mxu0 0.0
    %v1035 = vpop.f32.mrf.mxu0
    %v1036 = vadd.f32 %v1015, %v1035
    %1037 = vdwg.mxu0
    %1038 = vmatpush.xpose.msra.mxu0 0.0
    %1039 = vmatpush.xpose.msra.mxu0 0.0
    %1040 = vmatpush.xpose.msra.mxu0 0.0
    %1041 = vmatpush.xpose.msra.mxu0 0.0
    %1042 = vmatpush.xpose.msra.mxu0 0.0
    %1043 = vmatpush.xpose.msra.mxu0 0.0
    %1044 = vmatpush.xpose.msra.mxu0 0.0
    %1045 = vmatpush.xpose.msra.mxu0 0.0
    %1046 = vmatpush.xpose.msra.mxu0 0.0
    %1047 = vmatpush.xpose.msra.mxu0 0.0
    %1048 = vmatpush.xpose.msra.mxu0 0.0
    %1049 = vmatpush.xpose.msra.mxu0 0.0
    %1050 = vmatpush.xpose.msra.mxu0 0.0
    %1051 = vmatpush.xpose.msra.mxu0 0.0
    %1052 = vmatpush.xpose.msra.mxu0 0.0
    %v1053 = vand.u32 %v883, 4294901760
    %v1054 = vsub.f32 %v883, %v1053
    %v1055 = vand.u32 %v1054, 4294901760
    %v1056 = vsub.f32 %v1054, %v1055
    %v1057 = vand.u32 %v1056, 4294901760
    %1058 = vmatpush.xpose.msra.mxu0 %v1057
    %1059 = vmatmul.f32.gmra.mxu0 1.0
    %v1060 = vpop.f32.mrf.mxu0
    %v1061 = vadd.f32 %v1036, %v1060
    %1062 = vdwg.mxu0
    %1063 = vmatpush.xpose.msra.mxu0 0.0
    %1064 = vmatpush.xpose.msra.mxu0 0.0
    %1065 = vmatpush.xpose.msra.mxu0 0.0
    %1066 = vmatpush.xpose.msra.mxu0 0.0
    %1067 = vmatpush.xpose.msra.mxu0 0.0
    %1068 = vmatpush.xpose.msra.mxu0 0.0
    %1069 = vmatpush.xpose.msra.mxu0 0.0
    %1070 = vmatpush.xpose.msra.mxu0 0.0
    %1071 = vmatpush.xpose.msra.mxu0 0.0
    %1072 = vmatpush.xpose.msra.mxu0 0.0
    %1073 = vmatpush.xpose.msra.mxu0 0.0
    %1074 = vmatpush.xpose.msra.mxu0 0.0
    %1075 = vmatpush.xpose.msra.mxu0 0.0
    %1076 = vmatpush.xpose.msra.mxu0 0.0
    %1077 = vmatpush.xpose.msra.mxu0 0.0
    %v1078 = vand.u32 %v883, 4294901760
    %v1079 = vsub.f32 %v883, %v1078
    %1080 = vmatpush.xpose.msra.mxu0 %v1079
    %1081 = vmatmul.f32.gmra.mxu0 0.0
    %v1082 = vpop.f32.mrf.mxu0
    %v1083 = vadd.f32 %v1061, %v1082
    %1084 = vdwg.mxu0
    %1085 = vmatpush.xpose.msra.mxu0 0.0
    %1086 = vmatpush.xpose.msra.mxu0 0.0
    %1087 = vmatpush.xpose.msra.mxu0 0.0
    %1088 = vmatpush.xpose.msra.mxu0 0.0
    %1089 = vmatpush.xpose.msra.mxu0 0.0
    %1090 = vmatpush.xpose.msra.mxu0 0.0
    %1091 = vmatpush.xpose.msra.mxu0 0.0
    %1092 = vmatpush.xpose.msra.mxu0 0.0
    %1093 = vmatpush.xpose.msra.mxu0 0.0
    %1094 = vmatpush.xpose.msra.mxu0 0.0
    %1095 = vmatpush.xpose.msra.mxu0 0.0
    %1096 = vmatpush.xpose.msra.mxu0 0.0
    %1097 = vmatpush.xpose.msra.mxu0 0.0
    %1098 = vmatpush.xpose.msra.mxu0 0.0
    %1099 = vmatpush.xpose.msra.mxu0 0.0
    %v1100 = vand.u32 %v883, 4294901760
    %1101 = vmatpush.xpose.msra.mxu0 %v1100
    %1102 = vmatmul.f32.gmra.mxu0 0.0
    %v1103 = vpop.f32.mrf.mxu0
    %v1104 = vadd.f32 %v1083, %v1103
    %1105 = vdwg.mxu0
    %1106 = vmatpush.xpose.msra.mxu0 0.0
    %1107 = vmatpush.xpose.msra.mxu0 0.0
    %1108 = vmatpush.xpose.msra.mxu0 0.0
    %1109 = vmatpush.xpose.msra.mxu0 0.0
    %1110 = vmatpush.xpose.msra.mxu0 0.0
    %1111 = vmatpush.xpose.msra.mxu0 0.0
    %1112 = vmatpush.xpose.msra.mxu0 0.0
    %1113 = vmatpush.xpose.msra.mxu0 0.0
    %1114 = vmatpush.xpose.msra.mxu0 0.0
    %1115 = vmatpush.xpose.msra.mxu0 0.0
    %1116 = vmatpush.xpose.msra.mxu0 0.0
    %1117 = vmatpush.xpose.msra.mxu0 0.0
    %1118 = vmatpush.xpose.msra.mxu0 0.0
    %1119 = vmatpush.xpose.msra.mxu0 0.0
    %1120 = vmatpush.xpose.msra.mxu0 0.0
    %v1121 = vand.u32 %v883, 4294901760
    %v1122 = vsub.f32 %v883, %v1121
    %v1123 = vand.u32 %v1122, 4294901760
    %1124 = vmatpush.xpose.msra.mxu0 %v1123
    %1125 = vmatmul.f32.gmra.mxu0 1.0
    %v1126 = vpop.f32.mrf.mxu0
    %v1127 = vadd.f32 %v1104, %v1126
    %1128 = vdwg.mxu0
    %1129 = vmatpush.xpose.msra.mxu0 0.0
    %1130 = vmatpush.xpose.msra.mxu0 0.0
    %1131 = vmatpush.xpose.msra.mxu0 0.0
    %1132 = vmatpush.xpose.msra.mxu0 0.0
    %1133 = vmatpush.xpose.msra.mxu0 0.0
    %1134 = vmatpush.xpose.msra.mxu0 0.0
    %1135 = vmatpush.xpose.msra.mxu0 0.0
    %1136 = vmatpush.xpose.msra.mxu0 0.0
    %1137 = vmatpush.xpose.msra.mxu0 0.0
    %1138 = vmatpush.xpose.msra.mxu0 0.0
    %1139 = vmatpush.xpose.msra.mxu0 0.0
    %1140 = vmatpush.xpose.msra.mxu0 0.0
    %1141 = vmatpush.xpose.msra.mxu0 0.0
    %1142 = vmatpush.xpose.msra.mxu0 0.0
    %1143 = vmatpush.xpose.msra.mxu0 0.0
    %v1144 = vand.u32 %v883, 4294901760
    %1145 = vmatpush.xpose.msra.mxu0 %v1144
    %1146 = vmatmul.f32.gmra.mxu0 1.0
    %v1147 = vpop.f32.mrf.mxu0
    %v1148 = vadd.f32 %v1127, %v1147
    %1149 = vdwg.mxu0
    %v1150 = vsub.f32 %v880, %v1148
    %v1151 = vmul.f32 %v1150, 0.5
    %vm1152 = vcmask 57344
    %1153 = vst.msk [vmem:[#allocation2] sm:$0x1] %vm1152, %v1151
    // Predicated region
    $region10: #{tpu_custom_call.1} parent=1 // pred_check
      _
    $region11: #{tpu_custom_call.1} parent=1 // pred_check_branch
      %1155 = sbr.rel (0) target = $region13
    $region12: #{tpu_custom_call.1} parent=1 // pred_region
      %1157 = vsyncadd [#allocation3], 0
      %s1159 = sshll.u32 [#allocation2], 4
      %s1160 = int_to_ptr.vmem [resolvable:$true] %s1159
      %s1161 = sshll.u32 %s2, 4
      %s1162 = int_to_ptr.hbm [resolvable:$true] %s1161
      %1164 = dma.vmem_to_hbm [thread:$0]  %s1160, 16, %s1162, [#allocation3]
    $region13: #{tpu_custom_call.1} parent=1 // pred_fallthru
      _
    // Predicated region
    $region14: #{tpu_custom_call.1} parent=1 // pred_check
      _
    $region15: #{tpu_custom_call.1} parent=1 // pred_check_branch
      %1166 = sbr.rel (0) target = $region17
    $region16: #{tpu_custom_call.1} parent=1 // pred_region
      %1168 = dma.done [#allocation3], 16
    $region17: #{tpu_custom_call.1} parent=1 // pred_fallthru
      _
    %1169 = vsyncpa [#allocation3], 1

</llo_original>
